<compile_context>
chip_gen: v6e
topology: v6e:2x2x1
jax: 0.10.0
libtpu: 0.0.40
codegen_flags: <defaults>
</compile_context>

<pallas_src>
import jax
import jax.numpy as jnp
from jax.experimental import pallas as pl
from jax.experimental.pallas import tpu as pltpu


def _mlp_kernel(xT_ref, w1T_ref, b1T_ref, w2T_ref, b2T_ref, oT_ref):
    cdt = xT_ref.dtype  # compute dtype follows the inputs (bf16 on v6e/v7x, f32 on v5e)
    # layer 1: [H, S] @ [S, Bt] -> [H, Bt]; native-dtype MXU matmul, f32 accumulation.
    a1 = jnp.dot(w1T_ref[...], xT_ref[...], preferred_element_type=jnp.float32)
    a1 = a1 + b1T_ref[...]
    hT = jnp.tanh(a1.astype(cdt))            # tanh in compute dtype (bf16 EUP path if bf16)
    # layer 2: [H, H] @ [H, Bt] -> [H, Bt]
    a2 = jnp.dot(w2T_ref[...], hT, preferred_element_type=jnp.float32)
    a2 = a2 + b2T_ref[...]
    oT_ref[...] = jnp.tanh(a2.astype(cdt)).astype(oT_ref.dtype)


def _choose_block_b(B, state_size, n_hidden, itemsize):
    """Pick the lane-dim (batch) tile: a multiple of 128 dividing B that fits a ~24 MiB
    VMEM budget and, when possible, yields >= 2 grid steps (v7x has 2 TensorCores)."""
    if B % 128 != 0:
        return B  # small / ragged batch: single full-extent tile (always layout-legal)
    budget = 24 * 1024 * 1024
    per_col = 2 * (state_size + n_hidden) * itemsize  # double-buffered x^T + o^T columns
    max_bb = max(128, min(2048, (budget // max(per_col, 1)) // 128 * 128))
    for want_multi in (True, False):  # prefer >= 2 parallel grid steps
        for cand in (2048, 1024, 512, 256, 128):
            if cand <= max_bb and B % cand == 0 and (not want_multi or B // cand >= 2):
                return cand
    return B


def mlp_feature_extractor(x, w1, b1, w2, b2, *, block_b=None):
    """Fused tanh-MLP: returns tanh(tanh(x @ w1 + b1) @ w2 + b2).

    x: [B, state_size]; w1: [state_size, n_hidden]; w2: [n_hidden, n_hidden];
    b1, b2: [1, n_hidden] (or [n_hidden]).  Output: [B, n_hidden], dtype of x.
    """
    B, state_size = x.shape
    n_hidden = w1.shape[1]

    # Lane-dense (transposed) operands: batch on lanes, features on sublanes.
    xT = x.T                               # [state_size, B]
    w1T = w1.T                             # [n_hidden, state_size]
    w2T = w2.T                             # [n_hidden, n_hidden]
    b1T = jnp.reshape(b1, (n_hidden, 1))
    b2T = jnp.reshape(b2, (n_hidden, 1))

    if block_b is None:
        block_b = _choose_block_b(B, state_size, n_hidden, jnp.dtype(x.dtype).itemsize)
    assert B % block_b == 0, "block_b must divide the batch"
    assert block_b == B or block_b % 128 == 0, "batch tile must be full-extent or x128"

    # Explicit VMEM budget: double-buffered activation tiles + single-buffered weights.
    act_bytes = 2 * block_b * (state_size + n_hidden) * jnp.dtype(x.dtype).itemsize
    wgt_bytes = (state_size * n_hidden + n_hidden * n_hidden + 2 * n_hidden) \
        * jnp.dtype(w1.dtype).itemsize
    vmem_limit = int(min(max(4 * (act_bytes + wgt_bytes), 16 << 20), 32 << 20))

    resident = dict(pipeline_mode=pl.Buffered(1))  # constant index_map -> one VMEM copy
    oT = pl.pallas_call(
        _mlp_kernel,
        out_shape=jax.ShapeDtypeStruct((n_hidden, B), x.dtype),
        grid_spec=pltpu.PrefetchScalarGridSpec(
            num_scalar_prefetch=0,
            grid=(B // block_b,),
            in_specs=[
                pl.BlockSpec((state_size, block_b), lambda i: (0, i)),            # x^T tile
                pl.BlockSpec((n_hidden, state_size), lambda i: (0, 0), **resident),  # W1^T
                pl.BlockSpec((n_hidden, 1), lambda i: (0, 0), **resident),           # b1^T
                pl.BlockSpec((n_hidden, n_hidden), lambda i: (0, 0), **resident),    # W2^T
                pl.BlockSpec((n_hidden, 1), lambda i: (0, 0), **resident),           # b2^T
            ],
            out_specs=pl.BlockSpec((n_hidden, block_b), lambda i: (0, i)),
        ),
        compiler_params=pltpu.CompilerParams(
            dimension_semantics=("parallel",),
            vmem_limit_bytes=vmem_limit,
        ),
    )(xT, w1T, b1T, w2T, b2T)
    return oT.T                              # back to [B, n_hidden]


def init_params(key, state_size, n_hidden, dtype=jnp.float32):
    # Deterministic synthetic init (InitLinear's orthogonal/gain init is host-side
    # setup; exact scheme is irrelevant to kernel semantics — shapes match).
    k1, k2, k3, k4 = jax.random.split(key, 4)
    w1 = jax.random.normal(k1, (state_size, n_hidden), dtype) * (1.0 / jnp.sqrt(state_size))
    b1 = jax.random.normal(k2, (1, n_hidden), dtype) * 0.01
    w2 = jax.random.normal(k3, (n_hidden, n_hidden), dtype) * (1.0 / jnp.sqrt(n_hidden))
    b2 = jax.random.normal(k4, (1, n_hidden), dtype) * 0.01
    return w1, b1, w2, b2


def _ref(x, w1, b1, w2, b2):
    return jnp.tanh(jnp.tanh(x @ w1 + b1) @ w2 + b2)


if __name__ == "__main__":
    key = jax.random.PRNGKey(0)
    kx, kp = jax.random.split(key)

    batch = 256          # multiple of 128 -> lane-dense tiles, 2 parallel grid steps
    state_size = 16
    n_hidden = 32

    x = jax.random.normal(kx, (batch, state_size), jnp.float32)
    w1, b1, w2, b2 = init_params(kp, state_size, n_hidden)

    # f32 path (v5e-style): no forced casts, f32 accumulate on the MXU.
    out = jax.block_until_ready(mlp_feature_extractor(x, w1, b1, w2, b2))
    ref = _ref(x, w1, b1, w2, b2)
    assert out.shape == (batch, n_hidden)
    assert jnp.allclose(out, ref, atol=1e-4, rtol=1e-4)

    # bf16 fast path (v6e/v7x): bf16 MXU inputs + f32 accumulate, bf16 tanh.
    xb = x.astype(jnp.bfloat16)
    w1b, b1b, w2b, b2b = (p.astype(jnp.bfloat16) for p in (w1, b1, w2, b2))
    out_bf = jax.block_until_ready(mlp_feature_extractor(xb, w1b, b1b, w2b, b2b))
    ref_bf = _ref(xb.astype(jnp.float32), w1b.astype(jnp.float32),
                  b1b.astype(jnp.float32), w2b.astype(jnp.float32),
                  b2b.astype(jnp.float32))
    assert out_bf.dtype == jnp.bfloat16 and out_bf.shape == (batch, n_hidden)
    assert jnp.allclose(out_bf.astype(jnp.float32), ref_bf, atol=5e-2, rtol=0)

    print("KERNEL_OK")
</pallas_src>

<mosaic_0001>
module attributes {stable_mosaic.version = 11 : i64} {
  func.func @_mlp_kernel(%arg0: i32, %arg1: memref<16x128xf32, #tpu.memory_space<vmem>>, %arg2: memref<32x16xf32, #tpu.memory_space<vmem>>, %arg3: memref<32x1xf32, #tpu.memory_space<vmem>>, %arg4: memref<32x32xf32, #tpu.memory_space<vmem>>, %arg5: memref<32x1xf32, #tpu.memory_space<vmem>>, %arg6: memref<32x128xf32, #tpu.memory_space<vmem>>) attributes {dimension_semantics = [#tpu.dimension_semantics<parallel>], iteration_bounds = array<i64: 2>, scalar_prefetch = 0 : i64, scratch_operands = 0 : i64, tpu.core_type = #tpu.core_type<tc>, window_params = [{transform_indices = @transform_0, window_bounds = array<i64: 16, 128>}, {pipeline_mode = #tpu.pipeline_mode<synchronous>, transform_indices = @transform_1, window_bounds = array<i64: 32, 16>}, {pipeline_mode = #tpu.pipeline_mode<synchronous>, transform_indices = @transform_2, window_bounds = array<i64: 32, 1>}, {pipeline_mode = #tpu.pipeline_mode<synchronous>, transform_indices = @transform_3, window_bounds = array<i64: 32, 32>}, {pipeline_mode = #tpu.pipeline_mode<synchronous>, transform_indices = @transform_4, window_bounds = array<i64: 32, 1>}, {transform_indices = @transform_5, window_bounds = array<i64: 32, 128>}]} {
    %c0 = arith.constant 0 : index
    %c0_0 = arith.constant 0 : index
    %0 = vector.load %arg2[%c0, %c0_0] : memref<32x16xf32, #tpu.memory_space<vmem>>, vector<32x16xf32>
    %c0_1 = arith.constant 0 : index
    %c0_2 = arith.constant 0 : index
    %1 = vector.load %arg1[%c0_1, %c0_2] : memref<16x128xf32, #tpu.memory_space<vmem>>, vector<16x128xf32>
    %cst = arith.constant dense<0.000000e+00> : vector<32x128xf32>
    %2 = tpu.matmul %0, %1, %cst {dimension_numbers = #tpu.dot_dimension_numbers<[1], [0], [0], [1], [0, 0, 1, 1], [], []>} : vector<32x16xf32>, vector<16x128xf32>, vector<32x128xf32> -> vector<32x128xf32>
    %c0_3 = arith.constant 0 : index
    %c0_4 = arith.constant 0 : index
    %3 = vector.load %arg3[%c0_3, %c0_4] : memref<32x1xf32, #tpu.memory_space<vmem>>, vector<32x1xf32>
    %4 = vector.broadcast %3 : vector<32x1xf32> to vector<32x128xf32>
    %5 = arith.addf %2, %4 : vector<32x128xf32>
    %6 = math.tanh %5 : vector<32x128xf32>
    %c0_5 = arith.constant 0 : index
    %c0_6 = arith.constant 0 : index
    %7 = vector.load %arg4[%c0_5, %c0_6] : memref<32x32xf32, #tpu.memory_space<vmem>>, vector<32x32xf32>
    %cst_7 = arith.constant dense<0.000000e+00> : vector<32x128xf32>
    %8 = tpu.matmul %7, %6, %cst_7 {dimension_numbers = #tpu.dot_dimension_numbers<[1], [0], [0], [1], [0, 0, 1, 1], [], []>} : vector<32x32xf32>, vector<32x128xf32>, vector<32x128xf32> -> vector<32x128xf32>
    %c0_8 = arith.constant 0 : index
    %c0_9 = arith.constant 0 : index
    %9 = vector.load %arg5[%c0_8, %c0_9] : memref<32x1xf32, #tpu.memory_space<vmem>>, vector<32x1xf32>
    %10 = vector.broadcast %9 : vector<32x1xf32> to vector<32x128xf32>
    %11 = arith.addf %8, %10 : vector<32x128xf32>
    %12 = math.tanh %11 : vector<32x128xf32>
    %c0_10 = arith.constant 0 : index
    %c0_11 = arith.constant 0 : index
    %13 = vector.load %arg6[%c0_10, %c0_11] : memref<32x128xf32, #tpu.memory_space<vmem>>, vector<32x128xf32>
    tpu.vector_store %arg6[%c0_10, %c0_11], %12 {strides = array<i32>} : memref<32x128xf32, #tpu.memory_space<vmem>>, vector<32x128xf32>,
    return
  }
  func.func @transform_0(%arg0: i32) -> (i32, i32) {
    %c0_i32 = arith.constant 0 : i32
    %c0_i32_0 = arith.constant 0 : i32
    return %c0_i32, %arg0 : i32, i32
  }
  func.func @transform_1(%arg0: i32) -> (i32, i32) {
    %c0_i32 = arith.constant 0 : i32
    %c0_i32_0 = arith.constant 0 : i32
    %c0_i32_1 = arith.constant 0 : i32
    return %c0_i32, %c0_i32_0 : i32, i32
  }
  func.func @transform_2(%arg0: i32) -> (i32, i32) {
    %c0_i32 = arith.constant 0 : i32
    %c0_i32_0 = arith.constant 0 : i32
    %c0_i32_1 = arith.constant 0 : i32
    return %c0_i32, %c0_i32_0 : i32, i32
  }
  func.func @transform_3(%arg0: i32) -> (i32, i32) {
    %c0_i32 = arith.constant 0 : i32
    %c0_i32_0 = arith.constant 0 : i32
    %c0_i32_1 = arith.constant 0 : i32
    return %c0_i32, %c0_i32_0 : i32, i32
  }
  func.func @transform_4(%arg0: i32) -> (i32, i32) {
    %c0_i32 = arith.constant 0 : i32
    %c0_i32_0 = arith.constant 0 : i32
    %c0_i32_1 = arith.constant 0 : i32
    return %c0_i32, %c0_i32_0 : i32, i32
  }
  func.func @transform_5(%arg0: i32) -> (i32, i32) {
    %c0_i32 = arith.constant 0 : i32
    %c0_i32_0 = arith.constant 0 : i32
    return %c0_i32, %arg0 : i32, i32
  }
}

</mosaic_0001>

<llo_original>
// kernel: tpu_custom_call.1
$region0: #{tpu_custom_call.1}
  #allocation0 [shape = 'u32[]', space=smem, size = 0x4, offset = 0x4, fixed_abs, tag = 'smem constant byte address 0x4 - core index']
  #allocation1 [shape = 'u32[144,128]{1,0:T(1,128)}', space=vmem, size = 0x12000, scoped, tag = 'internal scratch']
  %s0 = inlined_call_operand.vmem [shape: f32[16,256], index: 0, kind: input, shape index: {}]
  %s1 = inlined_call_operand.vmem [shape: f32[32,16], index: 1, kind: input, shape index: {}]
  %s2 = inlined_call_operand.vmem [shape: f32[32,1], index: 2, kind: input, shape index: {}]
  %s3 = inlined_call_operand.vmem [shape: f32[32,32], index: 3, kind: input, shape index: {}]
  %s4 = inlined_call_operand.vmem [shape: f32[32,1], index: 4, kind: input, shape index: {}]
  %s5 = inlined_call_operand.hbm [shape: f32[32,256], index: 5, kind: output, shape index: {}]
  %s6 = sld [smem:[#allocation0]]
  $region91: #{tpu_custom_call.1} parent=0
    _
  %s8 = ssub.s32 1, %s6
  %s9 = scalar_select 0, %s8, %s6
  $region1: #{tpu_custom_call.1} parent=0
    #allocation2 [shape = 'u8[16384]{0}', space=vmem, size = 0x4000, scoped, tag = 'input window, operand 0']
    #allocation3 [shape = 'u8[32768]{0}', space=vmem, size = 0x8000, scoped, tag = 'output window, operand 0']
    #allocation4 [shape = 's32[2]{0}', space=sflag, size = 0x8, scoped, tag = 'scoped memory for tpu_custom_call.1']
    %10 = vsyncpa [#allocation4], 0
    %s11 = scalar_lea.sflag [#allocation4], 1
    %12 = vsyncpa %s11, 0
    loop: start=0, step=1, limit=4
    $region2: #{tpu_custom_call.1} parent=1 // loop_pre_header
      _
    $region3: #{tpu_custom_call.1} parent=1 // loop_header
      %s14 = sphi 0, %s18
      %p15 = scmp.ge.s32.totalorder %s14, 4
      %s24 = sphi 0, %s26
      %s27 = sphi 0, %s24
      %s28 = sphi 0, %s27
      %s44 = sphi 0, %s28
      %s48 = sphi 0, %s48
      %s50 = sphi 0, %s48
      %s51 = sphi 0, %s50
      %s65 = sphi 0, %s51
      %s69 = sphi 0, %s69
      %s71 = sphi 0, %s69
      %s72 = sphi 0, %s71
      %s86 = sphi 0, %s72
      %s90 = sphi 0, %s90
      %s92 = sphi 0, %s90
      %s93 = sphi 0, %s92
      %s107 = sphi 0, %s93
      %s111 = sphi 0, %s111
      %s113 = sphi 0, %s111
      %s114 = sphi 0, %s113
      %s128 = sphi 0, %s114
      %s134 = sphi 0, %s136
      %s137 = sphi 0, %s134
      %s138 = sphi 0, %s137
      %s154 = sphi 0, %s138
    $region4: #{tpu_custom_call.1} parent=1 // loop_header_branch
      %17 = sbr.rel (%p15) target = $region8
    $region5: #{tpu_custom_call.1} parent=1 // loop_body
      %s19 = ssub.s32 %s14, 1
      %s20 = ssub.s32 %s14, 2
      %s21 = sadd.s32 %s14, 1
      %s22 = ssub.s32 %s14, %s21
      %p23 = scmp.eq.s32.totalorder %s22, 0
      %s25 = sadd.s32 %s24, 1
      %s26 = scalar_select %p23, %s24, %s25
      %p29 = pneg %p23
      %p30 = scmp.eq.s32.totalorder %s14, 1
      %p31 = por %p29, %p30
      %p32 = scmp.ne.s32.totalorder %s24, %s27
      %p33 = scmp.eq.s32.totalorder %s14, 0
      %p34 = por %p32, %p33
      %p35 = scmp.ne.s32.totalorder %s24, %s27
      %p36 = scmp.eq.s32.totalorder %s19, 1
      %p37 = por %p35, %p36
      %p38 = scmp.ne.s32.totalorder %s27, %s28
      %p39 = scmp.eq.s32.totalorder %s19, 0
      %p40 = por %p38, %p39
      %p41 = scmp.ne.s32.totalorder %s27, %s28
      %p42 = scmp.eq.s32.totalorder %s20, 1
      %p43 = por %p41, %p42
      %p45 = scmp.ne.s32.totalorder %s28, %s44
      %p46 = scmp.eq.s32.totalorder %s20, 0
      %p47 = por %p45, %p46
      %s49 = sadd.s32 %s48, 1
      %p52 = scmp.eq.s32.totalorder %s14, 1
      %p53 = scmp.ne.s32.totalorder %s48, %s50
      %p54 = scmp.eq.s32.totalorder %s14, 0
      %p55 = por %p53, %p54
      %p56 = scmp.ne.s32.totalorder %s48, %s50
      %p57 = scmp.eq.s32.totalorder %s19, 1
      %p58 = por %p56, %p57
      %p59 = scmp.ne.s32.totalorder %s50, %s51
      %p60 = scmp.eq.s32.totalorder %s19, 0
      %p61 = por %p59, %p60
      %p62 = scmp.ne.s32.totalorder %s50, %s51
      %p63 = scmp.eq.s32.totalorder %s20, 1
      %p64 = por %p62, %p63
      %p66 = scmp.ne.s32.totalorder %s51, %s65
      %p67 = scmp.eq.s32.totalorder %s20, 0
      %p68 = por %p66, %p67
      %s70 = sadd.s32 %s69, 1
      %p73 = scmp.eq.s32.totalorder %s14, 1
      %p74 = scmp.ne.s32.totalorder %s69, %s71
      %p75 = scmp.eq.s32.totalorder %s14, 0
      %p76 = por %p74, %p75
      %p77 = scmp.ne.s32.totalorder %s69, %s71
      %p78 = scmp.eq.s32.totalorder %s19, 1
      %p79 = por %p77, %p78
      %p80 = scmp.ne.s32.totalorder %s71, %s72
      %p81 = scmp.eq.s32.totalorder %s19, 0
      %p82 = por %p80, %p81
      %p83 = scmp.ne.s32.totalorder %s71, %s72
      %p84 = scmp.eq.s32.totalorder %s20, 1
      %p85 = por %p83, %p84
      %p87 = scmp.ne.s32.totalorder %s72, %s86
      %p88 = scmp.eq.s32.totalorder %s20, 0
      %p89 = por %p87, %p88
      %s91 = sadd.s32 %s90, 1
      %p94 = scmp.eq.s32.totalorder %s14, 1
      %p95 = scmp.ne.s32.totalorder %s90, %s92
      %p96 = scmp.eq.s32.totalorder %s14, 0
      %p97 = por %p95, %p96
      %p98 = scmp.ne.s32.totalorder %s90, %s92
      %p99 = scmp.eq.s32.totalorder %s19, 1
      %p100 = por %p98, %p99
      %p101 = scmp.ne.s32.totalorder %s92, %s93
      %p102 = scmp.eq.s32.totalorder %s19, 0
      %p103 = por %p101, %p102
      %p104 = scmp.ne.s32.totalorder %s92, %s93
      %p105 = scmp.eq.s32.totalorder %s20, 1
      %p106 = por %p104, %p105
      %p108 = scmp.ne.s32.totalorder %s93, %s107
      %p109 = scmp.eq.s32.totalorder %s20, 0
      %p110 = por %p108, %p109
      %s112 = sadd.s32 %s111, 1
      %p115 = scmp.eq.s32.totalorder %s14, 1
      %p116 = scmp.ne.s32.totalorder %s111, %s113
      %p117 = scmp.eq.s32.totalorder %s14, 0
      %p118 = por %p116, %p117
      %p119 = scmp.ne.s32.totalorder %s111, %s113
      %p120 = scmp.eq.s32.totalorder %s19, 1
      %p121 = por %p119, %p120
      %p122 = scmp.ne.s32.totalorder %s113, %s114
      %p123 = scmp.eq.s32.totalorder %s19, 0
      %p124 = por %p122, %p123
      %p125 = scmp.ne.s32.totalorder %s113, %s114
      %p126 = scmp.eq.s32.totalorder %s20, 1
      %p127 = por %p125, %p126
      %p129 = scmp.ne.s32.totalorder %s114, %s128
      %p130 = scmp.eq.s32.totalorder %s20, 0
      %p131 = por %p129, %p130
      %s132 = ssub.s32 %s14, %s21
      %p133 = scmp.eq.s32.totalorder %s132, 0
      %s135 = sadd.s32 %s134, 1
      %s136 = scalar_select %p133, %s134, %s135
      %p139 = pneg %p133
      %p140 = scmp.eq.s32.totalorder %s14, 1
      %p141 = por %p139, %p140
      %p142 = scmp.ne.s32.totalorder %s134, %s137
      %p143 = scmp.eq.s32.totalorder %s14, 0
      %p144 = por %p142, %p143
      %p145 = scmp.ne.s32.totalorder %s134, %s137
      %p146 = scmp.eq.s32.totalorder %s19, 1
      %p147 = por %p145, %p146
      %p148 = scmp.ne.s32.totalorder %s137, %s138
      %p149 = scmp.eq.s32.totalorder %s19, 0
      %p150 = por %p148, %p149
      %p151 = scmp.ne.s32.totalorder %s137, %s138
      %p152 = scmp.eq.s32.totalorder %s20, 1
      %p153 = por %p151, %p152
      %p155 = scmp.ne.s32.totalorder %s138, %s154
      %p156 = scmp.eq.s32.totalorder %s20, 0
      %p157 = por %p155, %p156
      %p158 = scmp.le.s32.totalorder 1, %s14
      %p159 = scmp.lt.s32.totalorder %s14, 3
      %p160 = pnand %p158, %p159
      %p161 = pneg %p160
      // Predicated region
      $region9: #{tpu_custom_call.1} parent=5 // pred_check
        _
      $region10: #{tpu_custom_call.1} parent=5 // pred_check_branch
        %163 = sbr.rel (%p160) target = $region12
      $region11: #{tpu_custom_call.1} parent=5 // pred_region
        %s164 = ssub.s32 %s14, 1
        // Predicated region
        $region13: #{tpu_custom_call.1} parent=11 // pred_check
          %p165 = pneg %p61
        $region14: #{tpu_custom_call.1} parent=11 // pred_check_branch
          %167 = sbr.rel (%p165) target = $region16
        $region15: #{tpu_custom_call.1} parent=11 // pred_region
          _
        $region16: #{tpu_custom_call.1} parent=11 // pred_fallthru
          _
        // Predicated region
        $region17: #{tpu_custom_call.1} parent=11 // pred_check
          %p168 = pneg %p82
        $region18: #{tpu_custom_call.1} parent=11 // pred_check_branch
          %170 = sbr.rel (%p168) target = $region20
        $region19: #{tpu_custom_call.1} parent=11 // pred_region
          _
        $region20: #{tpu_custom_call.1} parent=11 // pred_fallthru
          _
        // Predicated region
        $region21: #{tpu_custom_call.1} parent=11 // pred_check
          %p171 = pneg %p103
        $region22: #{tpu_custom_call.1} parent=11 // pred_check_branch
          %173 = sbr.rel (%p171) target = $region24
        $region23: #{tpu_custom_call.1} parent=11 // pred_region
          _
        $region24: #{tpu_custom_call.1} parent=11 // pred_fallthru
          _
        // Predicated region
        $region25: #{tpu_custom_call.1} parent=11 // pred_check
          %p174 = pneg %p124
        $region26: #{tpu_custom_call.1} parent=11 // pred_check_branch
          %176 = sbr.rel (%p174) target = $region28
        $region27: #{tpu_custom_call.1} parent=11 // pred_region
          _
        $region28: #{tpu_custom_call.1} parent=11 // pred_fallthru
          _
      $region12: #{tpu_custom_call.1} parent=5 // pred_fallthru
        _
      %p177 = scmp.lt.s32.totalorder %s14, 2
      // Predicated region
      $region29: #{tpu_custom_call.1} parent=5 // pred_check
        %p178 = pneg %p177
      $region30: #{tpu_custom_call.1} parent=5 // pred_check_branch
        %180 = sbr.rel (%p178) target = $region32
      $region31: #{tpu_custom_call.1} parent=5 // pred_region
        // Predicated region
        $region33: #{tpu_custom_call.1} parent=31 // pred_check
          %p181 = pneg %p34
        $region34: #{tpu_custom_call.1} parent=31 // pred_check_branch
          %183 = sbr.rel (%p181) target = $region36
        $region35: #{tpu_custom_call.1} parent=31 // pred_region
          %s184 = sand.u32 %s24, 1
          %s185 = sand.u32 %s24, 1
          %s186 = smul.addr %s185, 16
          %s187 = scalar_lea.vmem [#allocation2], %s186
          %s188 = smul.addr %s14, 8
          %s189 = scalar_lea.vmem %s0, %s188
          // Predicated region
          $region37: #{tpu_custom_call.1} parent=35 // pred_check
            _
          $region38: #{tpu_custom_call.1} parent=35 // pred_check_branch
            %191 = sbr.rel (0) target = $region40
          $region39: #{tpu_custom_call.1} parent=35 // pred_region
            // Predicated region
            $region41: #{tpu_custom_call.1} parent=39 // pred_check
              _
            $region42: #{tpu_custom_call.1} parent=39 // pred_check_branch
              %193 = sbr.rel (0) target = $region44
            $region43: #{tpu_custom_call.1} parent=39 // pred_region
              // Predicated region
              $region56: #{tpu_custom_call.1} parent=43 // pred_check
                _
              $region57: #{tpu_custom_call.1} parent=43 // pred_check_branch
                %211 = sbr.rel (0) target = $region59
              $region58: #{tpu_custom_call.1} parent=43 // pred_region
                loop: start=0, step=1, limit=1
                $region60: #{tpu_custom_call.1} parent=58 // loop_pre_header
                  _
                $region61: #{tpu_custom_call.1} parent=58 // loop_header
                  %s213 = sphi 0, %s217
                  %p214 = scmp.ge.s32.totalorder %s213, 1
                  %s218 = sphi %s189, %s189
                  %s219 = sphi %s187, %s187
                $region62: #{tpu_custom_call.1} parent=58 // loop_header_branch
                  %216 = sbr.rel (%p214) target = $region66
                $region63: #{tpu_custom_call.1} parent=58 // loop_body
                  %v220 = vld [vmem:[%s218] sm:$0xff]
                  %221 = vst [vmem:[%s219] sm:$0xff] %v220
                  %v222 = vld [vmem:[%s218 + $0x10] sm:$0xff]
                  %223 = vst [vmem:[%s219 + $0x8] sm:$0xff] %v222
                $region64: #{tpu_custom_call.1} parent=58 // loop_footer
                  %s217 = sadd.s32 1, %s213
                $region65: #{tpu_custom_call.1} parent=58 // loop_footer_branch
                  %212 = sbr.rel target = $region61
                $region66: #{tpu_custom_call.1} parent=58 // loop_exit
                  _
              $region59: #{tpu_custom_call.1} parent=43 // pred_fallthru
                _
              // Predicated region
              $region67: #{tpu_custom_call.1} parent=43 // pred_check
                _
              $region68: #{tpu_custom_call.1} parent=43 // pred_check_branch
                %225 = sbr.rel target = $region70
              $region69: #{tpu_custom_call.1} parent=43 // pred_region
                _
              $region70: #{tpu_custom_call.1} parent=43 // pred_fallthru
                _
            $region44: #{tpu_custom_call.1} parent=39 // pred_fallthru
              _
            // Predicated region
            $region45: #{tpu_custom_call.1} parent=39 // pred_check
              _
            $region46: #{tpu_custom_call.1} parent=39 // pred_check_branch
              %195 = sbr.rel target = $region48
            $region47: #{tpu_custom_call.1} parent=39 // pred_region
              %s197 = ssub.s32 256, 1
              loop: start=0, step=1, limit=1
              $region49: #{tpu_custom_call.1} parent=47 // loop_pre_header
                _
              $region50: #{tpu_custom_call.1} parent=47 // loop_header
                %s199 = sphi 0, %s203
                %p200 = scmp.ge.s32.totalorder %s199, 1
                %s204 = sphi %s189, %s189
                %s205 = sphi %s187, %s187
              $region51: #{tpu_custom_call.1} parent=47 // loop_header_branch
                %202 = sbr.rel (%p200) target = $region55
              $region52: #{tpu_custom_call.1} parent=47 // loop_body
                %v206 = vld [vmem:[%s204] sm:%s197]
                %207 = vst [vmem:[%s205] sm:%s197] %v206
                %v208 = vld [vmem:[%s204 + $0x10] sm:%s197]
                %209 = vst [vmem:[%s205 + $0x8] sm:%s197] %v208
              $region53: #{tpu_custom_call.1} parent=47 // loop_footer
                %s203 = sadd.s32 1, %s199
              $region54: #{tpu_custom_call.1} parent=47 // loop_footer_branch
                %198 = sbr.rel target = $region50
              $region55: #{tpu_custom_call.1} parent=47 // loop_exit
                _
            $region48: #{tpu_custom_call.1} parent=39 // pred_fallthru
              _
          $region40: #{tpu_custom_call.1} parent=35 // pred_fallthru
            _
          %226 = vnop
        $region36: #{tpu_custom_call.1} parent=31 // pred_fallthru
          _
      $region32: #{tpu_custom_call.1} parent=5 // pred_fallthru
        _
      %p227 = scmp.le.s32.totalorder 1, %s14
      %p228 = scmp.lt.s32.totalorder %s14, 3
      %p229 = pnand %p227, %p228
      %p230 = pneg %p229
      // Predicated region
      $region71: #{tpu_custom_call.1} parent=5 // pred_check
        _
      $region72: #{tpu_custom_call.1} parent=5 // pred_check_branch
        %232 = sbr.rel (%p229) target = $region74
      $region73: #{tpu_custom_call.1} parent=5 // pred_region
        %s233 = ssub.s32 %s14, 1
        %s234 = sand.u32 %s27, 1
        %s235 = sand.u32 %s27, 1
        %s236 = smul.addr %s235, 16
        %s237 = scalar_lea.vmem [#allocation2], %s236
        // Predicated region
        $region75: #{tpu_custom_call.1} parent=73 // pred_check
          %p238 = pneg %p40
        $region76: #{tpu_custom_call.1} parent=73 // pred_check_branch
          %240 = sbr.rel (%p238) target = $region78
        $region77: #{tpu_custom_call.1} parent=73 // pred_region
          _
        $region78: #{tpu_custom_call.1} parent=73 // pred_fallthru
          _
        %s241 = sand.u32 %s27, 1
        %s242 = sand.u32 %s27, 1
        %s243 = smul.addr %s242, 16
        %s244 = scalar_lea.vmem [#allocation2], %s243
        %p245 = pneg %p40
        %p246 = pneg %p37
        %p247 = pneg %p61
        %p248 = pneg %p58
        %p249 = pneg %p82
        %p250 = pneg %p79
        %p251 = pneg %p103
        %p252 = pneg %p100
        %p253 = pneg %p124
        %p254 = pneg %p121
        %p255 = pneg %p150
        %p256 = pneg %p147
        %s257 = sand.u32 %s137, 1
        %s258 = scalar_lea.sflag [#allocation4], %s257
        %s259 = sand.u32 %s137, 1
        %s260 = smul.addr %s259, 32
        %s261 = scalar_lea.vmem [#allocation3], %s260
        %v262 = vld [vmem:[%s1] sm:$0xff]
        %v263 = vld [vmem:[%s1 + $0x8] sm:$0xff]
        %v264 = vld [vmem:[%s1 + $0x10] sm:$0xff]
        %v265 = vld [vmem:[%s1 + $0x18] sm:$0xff]
        %v266 = vld [vmem:[%s237] sm:$0xff]
        %v267 = vld [vmem:[%s237 + $0x8] sm:$0xff]
        %v268 = vld [vmem:[%s2] sm:$0xff]
        %v269 = vld [vmem:[%s2 + $0x8] sm:$0xff]
        %v270 = vld [vmem:[%s2 + $0x10] sm:$0xff]
        %v271 = vld [vmem:[%s2 + $0x18] sm:$0xff]
        %273 = vset.pattern.permute.xlu0 0
        %274 = vperm.xlu0 %273, %v268
        %v275 = vpop.permute.xlu0 %274
        %278 = vset.pattern.permute.xlu0 0
        %279 = vperm.xlu0 %278, %v269
        %v280 = vpop.permute.xlu0 %279
        %283 = vset.pattern.permute.xlu0 0
        %284 = vperm.xlu0 %283, %v270
        %v285 = vpop.permute.xlu0 %284
        %288 = vset.pattern.permute.xlu0 0
        %289 = vperm.xlu0 %288, %v271
        %v290 = vpop.permute.xlu0 %289
        %vm292 = vcmask 130048
        %v294 = vsel %vm292, %v262, 0
        %v297 = vsel %vm292, %v263, 0
        %v300 = vsel %vm292, %v264, 0
        %v303 = vsel %vm292, %v265, 0
        %305 = vmatprep.subr.mxu0 0.0
        %306 = vmatpush1.msra.mxu0 0.0
        %307 = vmatprep.subr.mxu0 0.0
        %308 = vmatpush1.msra.mxu0 0.0
        %309 = vmatprep.subr.mxu0 0.0
        %310 = vmatpush1.msra.mxu0 0.0
        %311 = vmatprep.subr.mxu0 0.0
        %312 = vmatpush1.msra.mxu0 0.0
        %313 = vmatprep.subr.mxu0 0.0
        %314 = vmatpush1.msra.mxu0 0.0
        %315 = vmatprep.subr.mxu0 0.0
        %316 = vmatpush1.msra.mxu0 0.0
        %317 = vmatprep.subr.mxu0 0.0
        %318 = vmatpush1.msra.mxu0 0.0
        %319 = vmatprep.subr.mxu0 0.0
        %320 = vmatpush1.msra.mxu0 0.0
        %321 = vmatprep.subr.mxu0 0.0
        %322 = vmatpush1.msra.mxu0 0.0
        %323 = vmatprep.subr.mxu0 0.0
        %324 = vmatpush1.msra.mxu0 0.0
        %325 = vmatprep.subr.mxu0 0.0
        %326 = vmatpush1.msra.mxu0 0.0
        %327 = vmatprep.subr.mxu0 0.0
        %328 = vmatpush1.msra.mxu0 0.0
        %329 = vmatprep.subr.mxu0 0.0
        %330 = vmatpush1.msra.mxu0 0.0
        %331 = vmatprep.subr.mxu0 0.0
        %332 = vmatpush1.msra.mxu0 0.0
        %333 = vmatprep.subr.mxu0 0.0
        %334 = vmatpush1.msra.mxu0 %v267
        %335 = vmatprep.subr.mxu0 0.0
        %336 = vmatpush1.msra.mxu0 %v266
        %337 = vmatprep.subr.mxu0 0.0
        %338 = vmatpush2.msra.mxu0 0.0
        %339 = vmatprep.subr.mxu0 0.0
        %340 = vmatpush2.msra.mxu0 0.0
        %341 = vmatprep.subr.mxu0 0.0
        %342 = vmatpush2.msra.mxu0 0.0
        %343 = vmatprep.subr.mxu0 0.0
        %344 = vmatpush2.msra.mxu0 0.0
        %345 = vmatprep.subr.mxu0 0.0
        %346 = vmatpush2.msra.mxu0 0.0
        %347 = vmatprep.subr.mxu0 0.0
        %348 = vmatpush2.msra.mxu0 0.0
        %349 = vmatprep.subr.mxu0 0.0
        %350 = vmatpush2.msra.mxu0 0.0
        %351 = vmatprep.subr.mxu0 0.0
        %352 = vmatpush2.msra.mxu0 0.0
        %353 = vmatprep.subr.mxu0 0.0
        %354 = vmatpush2.msra.mxu0 0.0
        %355 = vmatprep.subr.mxu0 0.0
        %356 = vmatpush2.msra.mxu0 0.0
        %357 = vmatprep.subr.mxu0 0.0
        %358 = vmatpush2.msra.mxu0 0.0
        %359 = vmatprep.subr.mxu0 0.0
        %360 = vmatpush2.msra.mxu0 0.0
        %361 = vmatprep.subr.mxu0 0.0
        %362 = vmatpush2.msra.mxu0 0.0
        %363 = vmatprep.subr.mxu0 0.0
        %364 = vmatpush2.msra.mxu0 0.0
        %365 = vmatprep.subr.mxu0 0.0
        %366 = vmatpush2.msra.mxu0 0.0
        %367 = vmatprep.subr.mxu0 0.0
        %368 = vmatpush2.msra.mxu0 0.0
        %369 = vmatprep.mubr.f32.mxu0 0.0
        %370 = vmatmul.mubr.f32.gmra.mxu0 %v294
        %v371 = vpop.f32.mrf.mxu0
        %v372 = vadd.f32 %v275, %v371
        %v373 = vpop.f32.mrf.mxu0
        %374 = vmatprep.mubr.f32.mxu0 0.0
        %375 = vmatmul.mubr.f32.gmra.mxu0 %v297
        %v376 = vpop.f32.mrf.mxu0
        %v377 = vadd.f32 %v280, %v376
        %v378 = vpop.f32.mrf.mxu0
        %379 = vmatprep.mubr.f32.mxu0 0.0
        %380 = vmatmul.mubr.f32.gmra.mxu0 %v300
        %v381 = vpop.f32.mrf.mxu0
        %v382 = vadd.f32 %v285, %v381
        %v383 = vpop.f32.mrf.mxu0
        %384 = vmatprep.mubr.f32.mxu0 0.0
        %385 = vmatmul.mubr.f32.gmra.mxu0 %v303
        %v386 = vpop.f32.mrf.mxu0
        %v387 = vadd.f32 %v290, %v386
        %v388 = vpop.f32.mrf.mxu0
        %389 = vdwg.mxu0
        %v390 = vtanh.pop %v372
        %v391 = vtanh.pop %v377
        %v392 = vtanh.pop %v382
        %v393 = vtanh.pop %v387
        %v394 = vld [vmem:[%s3] sm:$0xff]
        %v395 = vld [vmem:[%s3 + $0x8] sm:$0xff]
        %v396 = vld [vmem:[%s3 + $0x10] sm:$0xff]
        %v397 = vld [vmem:[%s3 + $0x18] sm:$0xff]
        %v398 = vld [vmem:[%s4] sm:$0xff]
        %v399 = vld [vmem:[%s4 + $0x8] sm:$0xff]
        %v400 = vld [vmem:[%s4 + $0x10] sm:$0xff]
        %v401 = vld [vmem:[%s4 + $0x18] sm:$0xff]
        %403 = vset.pattern.permute.xlu0 0
        %404 = vperm.xlu0 %403, %v398
        %v405 = vpop.permute.xlu0 %404
        %408 = vset.pattern.permute.xlu0 0
        %409 = vperm.xlu0 %408, %v399
        %v410 = vpop.permute.xlu0 %409
        %413 = vset.pattern.permute.xlu0 0
        %414 = vperm.xlu0 %413, %v400
        %v415 = vpop.permute.xlu0 %414
        %418 = vset.pattern.permute.xlu0 0
        %419 = vperm.xlu0 %418, %v401
        %v420 = vpop.permute.xlu0 %419
        %vm422 = vcmask 261120
        %v424 = vsel %vm422, %v394, 0
        %v427 = vsel %vm422, %v395, 0
        %v430 = vsel %vm422, %v396, 0
        %v433 = vsel %vm422, %v397, 0
        %435 = vmatprep.subr.mxu0 0.0
        %436 = vmatpush1.msra.mxu0 0.0
        %437 = vmatprep.subr.mxu0 0.0
        %438 = vmatpush1.msra.mxu0 0.0
        %439 = vmatprep.subr.mxu0 0.0
        %440 = vmatpush1.msra.mxu0 0.0
        %441 = vmatprep.subr.mxu0 0.0
        %442 = vmatpush1.msra.mxu0 0.0
        %443 = vmatprep.subr.mxu0 0.0
        %444 = vmatpush1.msra.mxu0 0.0
        %445 = vmatprep.subr.mxu0 0.0
        %446 = vmatpush1.msra.mxu0 0.0
        %447 = vmatprep.subr.mxu0 0.0
        %448 = vmatpush1.msra.mxu0 0.0
        %449 = vmatprep.subr.mxu0 0.0
        %450 = vmatpush1.msra.mxu0 0.0
        %451 = vmatprep.subr.mxu0 0.0
        %452 = vmatpush1.msra.mxu0 0.0
        %453 = vmatprep.subr.mxu0 0.0
        %454 = vmatpush1.msra.mxu0 0.0
        %455 = vmatprep.subr.mxu0 0.0
        %456 = vmatpush1.msra.mxu0 0.0
        %457 = vmatprep.subr.mxu0 0.0
        %458 = vmatpush1.msra.mxu0 0.0
        %459 = vmatprep.subr.mxu0 0.0
        %460 = vmatpush1.msra.mxu0 %v393
        %461 = vmatprep.subr.mxu0 0.0
        %462 = vmatpush1.msra.mxu0 %v392
        %463 = vmatprep.subr.mxu0 0.0
        %464 = vmatpush1.msra.mxu0 %v391
        %465 = vmatprep.subr.mxu0 0.0
        %466 = vmatpush1.msra.mxu0 %v390
        %467 = vmatprep.subr.mxu0 0.0
        %468 = vmatpush2.msra.mxu0 0.0
        %469 = vmatprep.subr.mxu0 0.0
        %470 = vmatpush2.msra.mxu0 0.0
        %471 = vmatprep.subr.mxu0 0.0
        %472 = vmatpush2.msra.mxu0 0.0
        %473 = vmatprep.subr.mxu0 0.0
        %474 = vmatpush2.msra.mxu0 0.0
        %475 = vmatprep.subr.mxu0 0.0
        %476 = vmatpush2.msra.mxu0 0.0
        %477 = vmatprep.subr.mxu0 0.0
        %478 = vmatpush2.msra.mxu0 0.0
        %479 = vmatprep.subr.mxu0 0.0
        %480 = vmatpush2.msra.mxu0 0.0
        %481 = vmatprep.subr.mxu0 0.0
        %482 = vmatpush2.msra.mxu0 0.0
        %483 = vmatprep.subr.mxu0 0.0
        %484 = vmatpush2.msra.mxu0 0.0
        %485 = vmatprep.subr.mxu0 0.0
        %486 = vmatpush2.msra.mxu0 0.0
        %487 = vmatprep.subr.mxu0 0.0
        %488 = vmatpush2.msra.mxu0 0.0
        %489 = vmatprep.subr.mxu0 0.0
        %490 = vmatpush2.msra.mxu0 0.0
        %491 = vmatprep.subr.mxu0 0.0
        %492 = vmatpush2.msra.mxu0 0.0
        %493 = vmatprep.subr.mxu0 0.0
        %494 = vmatpush2.msra.mxu0 0.0
        %495 = vmatprep.subr.mxu0 0.0
        %496 = vmatpush2.msra.mxu0 0.0
        %497 = vmatprep.subr.mxu0 0.0
        %498 = vmatpush2.msra.mxu0 0.0
        %499 = vmatprep.mubr.f32.mxu0 0.0
        %500 = vmatmul.mubr.f32.gmra.mxu0 %v424
        %v501 = vpop.f32.mrf.mxu0
        %v502 = vadd.f32 %v405, %v501
        %v503 = vpop.f32.mrf.mxu0
        %504 = vmatprep.mubr.f32.mxu0 0.0
        %505 = vmatmul.mubr.f32.gmra.mxu0 %v427
        %v506 = vpop.f32.mrf.mxu0
        %v507 = vadd.f32 %v410, %v506
        %v508 = vpop.f32.mrf.mxu0
        %509 = vmatprep.mubr.f32.mxu0 0.0
        %510 = vmatmul.mubr.f32.gmra.mxu0 %v430
        %v511 = vpop.f32.mrf.mxu0
        %v512 = vadd.f32 %v415, %v511
        %v513 = vpop.f32.mrf.mxu0
        %514 = vmatprep.mubr.f32.mxu0 0.0
        %515 = vmatmul.mubr.f32.gmra.mxu0 %v433
        %v516 = vpop.f32.mrf.mxu0
        %v517 = vadd.f32 %v420, %v516
        %v518 = vpop.f32.mrf.mxu0
        %519 = vdwg.mxu0
        %v520 = vtanh.pop %v502
        %v521 = vtanh.pop %v507
        %v522 = vtanh.pop %v512
        %v523 = vtanh.pop %v517
        %524 = vst [vmem:[%s261] sm:$0xff] %v520
        %525 = vst [vmem:[%s261 + $0x8] sm:$0xff] %v521
        %526 = vst [vmem:[%s261 + $0x10] sm:$0xff] %v522
        %527 = vst [vmem:[%s261 + $0x18] sm:$0xff] %v523
        %s528 = sand.u32 %s137, 1
        %s529 = scalar_lea.sflag [#allocation4], %s528
        %s530 = sand.u32 %s137, 1
        %s531 = smul.addr %s530, 32
        %s532 = scalar_lea.vmem [#allocation3], %s531
        // Predicated region
        $region79: #{tpu_custom_call.1} parent=73 // pred_check
          %p533 = pneg %p147
        $region80: #{tpu_custom_call.1} parent=73 // pred_check_branch
          %535 = sbr.rel (%p533) target = $region82
        $region81: #{tpu_custom_call.1} parent=73 // pred_region
          %s537 = ssub.s32 512, 512
          %538 = vsyncadd %s529, %s537
          %s539 = smul.addr %s19, 128
          %s540 = scalar_lea.hbm %s5, %s539
          %s541 = sshll.u32 %s532, 4
          %s542 = int_to_ptr.vmem [resolvable:$true] %s541
          %547 = dma.vmem_to_hbm [thread:$0]  %s542, 512, %s540, %s529, 128, 256, 8
        $region82: #{tpu_custom_call.1} parent=73 // pred_fallthru
          _
      $region74: #{tpu_custom_call.1} parent=5 // pred_fallthru
        _
      %p548 = scmp.le.s32.totalorder 2, %s14
      // Predicated region
      $region83: #{tpu_custom_call.1} parent=5 // pred_check
        %p549 = pneg %p548
      $region84: #{tpu_custom_call.1} parent=5 // pred_check_branch
        %551 = sbr.rel (%p549) target = $region86
      $region85: #{tpu_custom_call.1} parent=5 // pred_region
        %s552 = ssub.s32 %s14, 2
        // Predicated region
        $region87: #{tpu_custom_call.1} parent=85 // pred_check
          %p553 = pneg %p153
        $region88: #{tpu_custom_call.1} parent=85 // pred_check_branch
          %555 = sbr.rel (%p553) target = $region90
        $region89: #{tpu_custom_call.1} parent=85 // pred_region
          %s556 = sand.u32 %s138, 1
          %s557 = scalar_lea.sflag [#allocation4], %s556
          %s558 = sand.u32 %s138, 1
          %s559 = smul.addr %s558, 32
          %s560 = scalar_lea.vmem [#allocation3], %s559
          %561 = dma.done %s557, 512
        $region90: #{tpu_custom_call.1} parent=85 // pred_fallthru
          _
      $region86: #{tpu_custom_call.1} parent=5 // pred_fallthru
        _
    $region6: #{tpu_custom_call.1} parent=1 // loop_footer
      %s18 = sadd.s32 1, %s14
    $region7: #{tpu_custom_call.1} parent=1 // loop_footer_branch
      %13 = sbr.rel target = $region3
    $region8: #{tpu_custom_call.1} parent=1 // loop_exit
      _
    %562 = vsyncpa [#allocation4], 1
    %s563 = scalar_lea.sflag [#allocation4], 1
    %564 = vsyncpa %s563, 1

</llo_original>
